<compile_context>
chip_gen: v5e
topology: v5e:2x2
jax: 0.10.0
libtpu: 0.0.40
codegen_flags: <defaults>
</compile_context>

<pallas_src>
import math

import jax
import jax.numpy as jnp
import numpy as np
from jax.experimental import pallas as pl
from jax.experimental.pallas import tpu as pltpu


# ---------------- config (small, consistent with BertConfig) ----------------
BATCH = 2
SEQ = 8
HIDDEN = 32
INTERMEDIATE = 4 * HIDDEN      # 128 -> lane-dense output

# Row-tile cap chosen against the tightest budget (v5e's 16 MiB scoped VMEM) at
# real BERT dims (H=768, D_ff=3072, bf16 inputs/weights, f32 output):
#   W 4.7 MB + 2 x (256,768) bf16 x-tiles + 2 x (256,3072) f32 out-tiles ~= 12 MB.
_TILE_M_MAX = 256


def _round_up(x, m):
    return ((x + m - 1) // m) * m


# ----------------------------- in-kernel math --------------------------------
def _erf_poly(x):
    """erf via Abramowitz & Stegun 7.1.26 (max abs error ~1.5e-7, fp32-level).

    Uses exp (EUP), approx-reciprocal + one Newton step (EUP + 2 VALU ops), and
    mul/add/where — all with guaranteed Mosaic lowerings.
    """
    # TODO(synk): switch to jax.lax.erf once an exact erf Mosaic lowering is guaranteed.
    a1 = 0.254829592
    a2 = -0.284496736
    a3 = 1.421413741
    a4 = -1.453152027
    a5 = 1.061405429
    p = 0.3275911

    ax = jnp.abs(x)
    d = 1.0 + p * ax
    # EUP approx reciprocal (~1e-3 rel) + one Newton refinement -> ~fp32 accurate,
    # keeps the divide off the VALU slots.
    t0 = pl.reciprocal(d, approx=True)
    t = t0 * (2.0 - d * t0)
    poly = ((((a5 * t + a4) * t + a3) * t + a2) * t + a1) * t
    y = 1.0 - poly * jnp.exp(-ax * ax)          # exp -> EUP slot
    return jnp.where(x >= 0.0, y, -y)


def _gelu_erf(x):
    return 0.5 * x * (1.0 + _erf_poly(x * (1.0 / math.sqrt(2.0))))


# --------------------------------- kernel ------------------------------------
def bert_intermediate_kernel(x_ref, w_ref, b_ref, o_ref):
    """One row-tile per grid step: o = gelu(x @ W.T + b).

    x_ref: (TM, H)  bf16      w_ref: (4H, H) bf16 (nn.Linear layout, no transpose)
    b_ref: (1, 4H)  f32       o_ref: (TM, 4H) f32
    """
    # trans_b matmul on the MXU: contract both last (H) dims, accumulate in f32.
    h = jax.lax.dot_general(
        x_ref[...], w_ref[...],
        dimension_numbers=(((1,), (1,)), ((), ())),
        preferred_element_type=jnp.float32)
    h = h + b_ref[...]                          # bias add in f32
    o_ref[...] = _gelu_erf(h).astype(o_ref.dtype)


# -------------------------------- wrapper -------------------------------------
def bert_intermediate(hidden_states, weight, bias, *, tile_m_max=_TILE_M_MAX):
    """hidden_states: (B, S, H).
    weight: (4H, H) (PyTorch nn.Linear layout), bias: (4H,).
    Returns (B, S, 4H) fp32.
    """
    B, S, H = hidden_states.shape
    D_ff = weight.shape[0]
    M = B * S

    # bf16 inputs/weights for the MXU (f32 accumulation inside the kernel).
    x2 = hidden_states.reshape(M, H).astype(jnp.bfloat16)
    w = weight.astype(jnp.bfloat16)             # keep (4H, H): no host-side transpose
    b = bias.reshape(1, D_ff).astype(jnp.float32)

    # Fixed, VMEM-budgeted row tile (multiple of 8); pad rows up to a tile multiple
    # so the grid divides exactly, slice the pad off afterwards.
    tile_m = min(tile_m_max, _round_up(M, 8))
    num_tiles = pl.cdiv(M, tile_m)
    M_pad = num_tiles * tile_m
    if M_pad != M:
        x2 = jnp.pad(x2, ((0, M_pad - M), (0, 0)))

    out2 = pl.pallas_call(
        bert_intermediate_kernel,
        out_shape=jax.ShapeDtypeStruct((M_pad, D_ff), jnp.float32),
        grid_spec=pltpu.PrefetchScalarGridSpec(
            num_scalar_prefetch=0,
            grid=(num_tiles,),
            in_specs=[
                pl.BlockSpec((tile_m, H), lambda i: (i, 0)),   # activations (row tile)
                pl.BlockSpec((D_ff, H), lambda i: (0, 0)),     # weight, VMEM-resident
                pl.BlockSpec((1, D_ff), lambda i: (0, 0)),     # bias,   VMEM-resident
            ],
            out_specs=pl.BlockSpec((tile_m, D_ff), lambda i: (i, 0)),
        ),
        compiler_params=pltpu.CompilerParams(
            dimension_semantics=("parallel",)),   # row axis shards across v7x's 2 TCs
    )(x2, w, b)

    if M_pad != M:
        out2 = out2[:M]
    return out2.reshape(B, S, D_ff)


# ------------------------- pure-JAX reference ---------------------------------
def bert_intermediate_ref(hidden_states, weight, bias):
    h = hidden_states @ weight.T + bias
    return 0.5 * h * (1.0 + jax.scipy.special.erf(h / jnp.sqrt(2.0)))


if __name__ == "__main__":
    key = jax.random.PRNGKey(0)
    kx, kw, kb = jax.random.split(key, 3)

    x = jax.random.normal(kx, (BATCH, SEQ, HIDDEN), dtype=jnp.float32)
    # nn.Linear-style parameters (weight: (out, in)), scaled so the gelu
    # nonlinearity is actually exercised.
    weight = (0.2 * jax.random.normal(kw, (INTERMEDIATE, HIDDEN))).astype(jnp.float32)
    bias = (0.2 * jax.random.normal(kb, (INTERMEDIATE,))).astype(jnp.float32)

    out = bert_intermediate(x, weight, bias)
    out = jax.block_until_ready(out)

    # Exact f32 reference: kernel uses bf16 inputs/weights (f32 accumulation), so
    # allow bf16-level input-quantization error.
    ref_f32 = bert_intermediate_ref(x, weight, bias)
    np.testing.assert_allclose(np.asarray(out), np.asarray(ref_f32),
                               rtol=2e-2, atol=2e-2)

    # Reference that mirrors the bf16 cast: isolates the erf-poly / approx-recip
    # error, which must stay fp32-tight.
    ref_bf16 = bert_intermediate_ref(
        x.astype(jnp.bfloat16).astype(jnp.float32),
        weight.astype(jnp.bfloat16).astype(jnp.float32),
        bias)
    np.testing.assert_allclose(np.asarray(out), np.asarray(ref_bf16),
                               rtol=1e-4, atol=1e-4)

    print("KERNEL_OK")
</pallas_src>

<mosaic_0001>
module attributes {stable_mosaic.version = 11 : i64} {
  func.func @bert_intermediate_kernel(%arg0: i32, %arg1: memref<16x32xbf16, #tpu.memory_space<vmem>>, %arg2: memref<128x32xbf16, #tpu.memory_space<vmem>>, %arg3: memref<1x128xf32, #tpu.memory_space<vmem>>, %arg4: memref<16x128xf32, #tpu.memory_space<vmem>>) attributes {dimension_semantics = [#tpu.dimension_semantics<parallel>], iteration_bounds = array<i64: 1>, scalar_prefetch = 0 : i64, scratch_operands = 0 : i64, tpu.core_type = #tpu.core_type<tc>, window_params = [{transform_indices = @transform_0, window_bounds = array<i64: 16, 32>}, {pipeline_mode = #tpu.pipeline_mode<synchronous>, transform_indices = @transform_1, window_bounds = array<i64: 128, 32>}, {pipeline_mode = #tpu.pipeline_mode<synchronous>, transform_indices = @transform_2, window_bounds = array<i64: 1, 128>}, {transform_indices = @transform_3, window_bounds = array<i64: 16, 128>}]} {
    %c0 = arith.constant 0 : index
    %c0_0 = arith.constant 0 : index
    %0 = vector.load %arg1[%c0, %c0_0] : memref<16x32xbf16, #tpu.memory_space<vmem>>, vector<16x32xbf16>
    %c0_1 = arith.constant 0 : index
    %c0_2 = arith.constant 0 : index
    %1 = vector.load %arg2[%c0_1, %c0_2] : memref<128x32xbf16, #tpu.memory_space<vmem>>, vector<128x32xbf16>
    %cst = arith.constant dense<0.000000e+00> : vector<16x128xf32>
    %2 = tpu.matmul %0, %1, %cst {dimension_numbers = #tpu.dot_dimension_numbers<[1], [1], [0], [0], [0, 0, 1, 0], [], []>} : vector<16x32xbf16>, vector<128x32xbf16>, vector<16x128xf32> -> vector<16x128xf32>
    %c0_3 = arith.constant 0 : index
    %c0_4 = arith.constant 0 : index
    %3 = vector.load %arg3[%c0_3, %c0_4] : memref<1x128xf32, #tpu.memory_space<vmem>>, vector<1x128xf32>
    %4 = vector.broadcast %3 : vector<1x128xf32> to vector<16x128xf32>
    %5 = arith.addf %2, %4 : vector<16x128xf32>
    %cst_5 = arith.constant 5.000000e-01 : f32
    %6 = vector.broadcast %cst_5 : f32 to vector<16x128xf32>
    %7 = arith.mulf %6, %5 : vector<16x128xf32>
    %cst_6 = arith.constant 0.707106769 : f32
    %8 = vector.broadcast %cst_6 : f32 to vector<16x128xf32>
    %9 = arith.mulf %5, %8 : vector<16x128xf32>
    %10 = math.absf %9 : vector<16x128xf32>
    %cst_7 = arith.constant 0.327591091 : f32
    %11 = vector.broadcast %cst_7 : f32 to vector<16x128xf32>
    %12 = arith.mulf %11, %10 : vector<16x128xf32>
    %cst_8 = arith.constant 1.000000e+00 : f32
    %13 = vector.broadcast %cst_8 : f32 to vector<16x128xf32>
    %14 = arith.addf %13, %12 : vector<16x128xf32>
    %15 = tpu.reciprocal %14 {approx = true} : vector<16x128xf32> -> vector<16x128xf32>
    %16 = arith.mulf %14, %15 : vector<16x128xf32>
    %cst_9 = arith.constant 2.000000e+00 : f32
    %17 = vector.broadcast %cst_9 : f32 to vector<16x128xf32>
    %18 = arith.subf %17, %16 : vector<16x128xf32>
    %19 = arith.mulf %15, %18 : vector<16x128xf32>
    %cst_10 = arith.constant 1.06140542 : f32
    %20 = vector.broadcast %cst_10 : f32 to vector<16x128xf32>
    %21 = arith.mulf %20, %19 : vector<16x128xf32>
    %cst_11 = arith.constant -1.45315206 : f32
    %22 = vector.broadcast %cst_11 : f32 to vector<16x128xf32>
    %23 = arith.addf %21, %22 : vector<16x128xf32>
    %24 = arith.mulf %23, %19 : vector<16x128xf32>
    %cst_12 = arith.constant 1.42141378 : f32
    %25 = vector.broadcast %cst_12 : f32 to vector<16x128xf32>
    %26 = arith.addf %24, %25 : vector<16x128xf32>
    %27 = arith.mulf %26, %19 : vector<16x128xf32>
    %cst_13 = arith.constant -0.284496725 : f32
    %28 = vector.broadcast %cst_13 : f32 to vector<16x128xf32>
    %29 = arith.addf %27, %28 : vector<16x128xf32>
    %30 = arith.mulf %29, %19 : vector<16x128xf32>
    %cst_14 = arith.constant 0.254829586 : f32
    %31 = vector.broadcast %cst_14 : f32 to vector<16x128xf32>
    %32 = arith.addf %30, %31 : vector<16x128xf32>
    %33 = arith.mulf %32, %19 : vector<16x128xf32>
    %cst_15 = arith.constant 0.000000e+00 : f32
    %34 = vector.broadcast %cst_15 : f32 to vector<16x128xf32>
    %35 = arith.subf %34, %10 : vector<16x128xf32>
    %36 = arith.mulf %35, %10 : vector<16x128xf32>
    %37 = math.exp %36 : vector<16x128xf32>
    %38 = arith.mulf %33, %37 : vector<16x128xf32>
    %cst_16 = arith.constant 1.000000e+00 : f32
    %39 = vector.broadcast %cst_16 : f32 to vector<16x128xf32>
    %40 = arith.subf %39, %38 : vector<16x128xf32>
    %cst_17 = arith.constant 0.000000e+00 : f32
    %41 = vector.broadcast %cst_17 : f32 to vector<16x128xf32>
    %42 = arith.cmpf oge, %9, %41 : vector<16x128xf32>
    %cst_18 = arith.constant 0.000000e+00 : f32
    %43 = vector.broadcast %cst_18 : f32 to vector<16x128xf32>
    %44 = arith.subf %43, %40 : vector<16x128xf32>
    %45 = arith.select %42, %40, %44 : vector<16x128xi1>, vector<16x128xf32>
    %cst_19 = arith.constant 1.000000e+00 : f32
    %46 = vector.broadcast %cst_19 : f32 to vector<16x128xf32>
    %47 = arith.addf %46, %45 : vector<16x128xf32>
    %48 = arith.mulf %7, %47 : vector<16x128xf32>
    %c0_20 = arith.constant 0 : index
    %c0_21 = arith.constant 0 : index
    %49 = vector.load %arg4[%c0_20, %c0_21] : memref<16x128xf32, #tpu.memory_space<vmem>>, vector<16x128xf32>
    tpu.vector_store %arg4[%c0_20, %c0_21], %48 {strides = array<i32>} : memref<16x128xf32, #tpu.memory_space<vmem>>, vector<16x128xf32>,
    return
  }
  func.func @transform_0(%arg0: i32) -> (i32, i32) {
    %c0_i32 = arith.constant 0 : i32
    %c0_i32_0 = arith.constant 0 : i32
    return %arg0, %c0_i32 : i32, i32
  }
  func.func @transform_1(%arg0: i32) -> (i32, i32) {
    %c0_i32 = arith.constant 0 : i32
    %c0_i32_0 = arith.constant 0 : i32
    %c0_i32_1 = arith.constant 0 : i32
    return %c0_i32, %c0_i32_0 : i32, i32
  }
  func.func @transform_2(%arg0: i32) -> (i32, i32) {
    %c0_i32 = arith.constant 0 : i32
    %c0_i32_0 = arith.constant 0 : i32
    %c0_i32_1 = arith.constant 0 : i32
    return %c0_i32, %c0_i32_0 : i32, i32
  }
  func.func @transform_3(%arg0: i32) -> (i32, i32) {
    %c0_i32 = arith.constant 0 : i32
    %c0_i32_0 = arith.constant 0 : i32
    return %arg0, %c0_i32 : i32, i32
  }
}

</mosaic_0001>

<llo_original>
// kernel: tpu_custom_call.1
$region0: #{tpu_custom_call.1}
  #allocation0 [shape = 'u32[]', space=smem, size = 0x4, offset = 0x4, fixed_abs, tag = 'smem constant byte address 0x4 - core index']
  #allocation1 [shape = 'u32[72,128]{1,0:T(1,128)}', space=vmem, size = 0x9000, scoped, tag = 'internal scratch']
  %s0 = inlined_call_operand.vmem [shape: bf16[16,32], index: 0, kind: input, shape index: {}]
  %s1 = inlined_call_operand.vmem [shape: bf16[128,32], index: 1, kind: input, shape index: {}]
  %s2 = inlined_call_operand.vmem [shape: f32[1,128], index: 2, kind: input, shape index: {}]
  %s3 = inlined_call_operand.hbm [shape: f32[16,128], index: 3, kind: output, shape index: {}]
  %s4 = sld [smem:[#allocation0]]
  $region22: #{tpu_custom_call.1} parent=0
    _
  %s6 = ssub.s32 1, %s4
  %s7 = scalar_select 0, %s6, %s4
  $region1: #{tpu_custom_call.1} parent=0
    #allocation2 [shape = 'u8[8192]{0}', space=vmem, size = 0x2000, scoped, tag = 'output window, operand 0, single buffered']
    #allocation3 [shape = 's32[1]{0}', space=sflag, size = 0x4, scoped, tag = 'scoped memory for tpu_custom_call.1']
    %8 = vsyncpa [#allocation3], 0
    // Predicated region
    $region2: #{tpu_custom_call.1} parent=1 // pred_check
      _
    $region3: #{tpu_custom_call.1} parent=1 // pred_check_branch
      %10 = sbr.rel (0) target = $region5
    $region4: #{tpu_custom_call.1} parent=1 // pred_region
      _
    $region5: #{tpu_custom_call.1} parent=1 // pred_fallthru
      _
    // Predicated region
    $region6: #{tpu_custom_call.1} parent=1 // pred_check
      _
    $region7: #{tpu_custom_call.1} parent=1 // pred_check_branch
      %12 = sbr.rel (0) target = $region9
    $region8: #{tpu_custom_call.1} parent=1 // pred_region
      _
    $region9: #{tpu_custom_call.1} parent=1 // pred_fallthru
      _
    // Predicated region
    $region10: #{tpu_custom_call.1} parent=1 // pred_check
      _
    $region11: #{tpu_custom_call.1} parent=1 // pred_check_branch
      %14 = sbr.rel (0) target = $region13
    $region12: #{tpu_custom_call.1} parent=1 // pred_region
      _
    $region13: #{tpu_custom_call.1} parent=1 // pred_fallthru
      _
    %v15 = vld [vmem:[%s0] sm:$0xf]
    %v16 = vld [vmem:[%s0 + $0x4] sm:$0xf]
    %v17 = vld [vmem:[%s1] sm:$0xf]
    %v18 = vld [vmem:[%s1 + $0x4] sm:$0xf]
    %v19 = vld [vmem:[%s1 + $0x8] sm:$0xf]
    %v20 = vld [vmem:[%s1 + $0xc] sm:$0xf]
    %v21 = vld [vmem:[%s1 + $0x10] sm:$0xf]
    %v22 = vld [vmem:[%s1 + $0x14] sm:$0xf]
    %v23 = vld [vmem:[%s1 + $0x18] sm:$0xf]
    %v24 = vld [vmem:[%s1 + $0x1c] sm:$0xf]
    %v25 = vld [vmem:[%s1 + $0x20] sm:$0xf]
    %v26 = vld [vmem:[%s1 + $0x24] sm:$0xf]
    %v27 = vld [vmem:[%s1 + $0x28] sm:$0xf]
    %v28 = vld [vmem:[%s1 + $0x2c] sm:$0xf]
    %v29 = vld [vmem:[%s1 + $0x30] sm:$0xf]
    %v30 = vld [vmem:[%s1 + $0x34] sm:$0xf]
    %v31 = vld [vmem:[%s1 + $0x38] sm:$0xf]
    %v32 = vld [vmem:[%s1 + $0x3c] sm:$0xf]
    %v33 = vld [vmem:[%s2] sm:$0x1]
    %v35 = vperm.slane %v33, 0
    %v39 = vunpack.c.l.b16 %v15
    %v40 = vunpack.c.l.b16 %v16
    %v41 = vpack.c.b16 %v40, %v39
    %v58 = vunpack.c.l.b16 %v17
    %v59 = vunpack.c.l.b16 %v18
    %v60 = vunpack.c.l.b16 %v19
    %v61 = vunpack.c.l.b16 %v20
    %v62 = vunpack.c.l.b16 %v21
    %v63 = vunpack.c.l.b16 %v22
    %v64 = vunpack.c.l.b16 %v23
    %v65 = vunpack.c.l.b16 %v24
    %v66 = vunpack.c.l.b16 %v25
    %v67 = vunpack.c.l.b16 %v26
    %v68 = vunpack.c.l.b16 %v27
    %v69 = vunpack.c.l.b16 %v28
    %v70 = vunpack.c.l.b16 %v29
    %v71 = vunpack.c.l.b16 %v30
    %v72 = vunpack.c.l.b16 %v31
    %v73 = vunpack.c.l.b16 %v32
    %v74 = vpack.c.b16 %v59, %v58
    %v75 = vpack.c.b16 %v61, %v60
    %v76 = vpack.c.b16 %v63, %v62
    %v77 = vpack.c.b16 %v65, %v64
    %v78 = vpack.c.b16 %v67, %v66
    %v79 = vpack.c.b16 %v69, %v68
    %v80 = vpack.c.b16 %v71, %v70
    %v81 = vpack.c.b16 %v73, %v72
    %vm82 = vcmask 261120
    %v84 = vsel %vm82, %v41, 0
    %v87 = vsel %vm82, %v74, 0
    %v90 = vsel %vm82, %v75, 0
    %v93 = vsel %vm82, %v76, 0
    %v96 = vsel %vm82, %v77, 0
    %v99 = vsel %vm82, %v78, 0
    %v102 = vsel %vm82, %v79, 0
    %v105 = vsel %vm82, %v80, 0
    %v108 = vsel %vm82, %v81, 0
    %110 = vmatpush.bf16.xpose.msra.mxu0 %v108
    %111 = vmatpush.bf16.xpose.msra.mxu0 %v105
    %112 = vmatpush.bf16.xpose.msra.mxu0 %v102
    %113 = vmatpush.bf16.xpose.msra.mxu0 %v99
    %114 = vmatpush.bf16.xpose.msra.mxu0 %v96
    %115 = vmatpush.bf16.xpose.msra.mxu0 %v93
    %116 = vmatpush.bf16.xpose.msra.mxu0 %v90
    %117 = vmatpush.bf16.xpose.msra.mxu0 %v87
    %118 = vmatmul.bf16.gmra.mxu0 %v84
    %v119 = vpop.f32.mrf.mxu0
    %v120 = vadd.f32 %v35, %v119
    %v121 = vpop.f32.mrf.mxu0
    %v122 = vadd.f32 %v35, %v121
    %123 = vdwg.mxu0
    %v124 = vmul.f32 %v120, 0.5
    %v125 = vmul.f32 %v122, 0.5
    %v126 = vmul.f32 %v120, 0.70710677
    %v127 = vmul.f32 %v122, 0.70710677
    %v128 = vand.u32 2147483647, %v126
    %v129 = vand.u32 2147483647, %v127
    %v130 = vmul.f32 %v128, 0.3275911
    %v131 = vmul.f32 %v129, 0.3275911
    %v132 = vadd.f32 %v130, 1.0
    %v133 = vadd.f32 %v131, 1.0
    %v134 = vrcp.pop %v132
    %v135 = vrcp.pop %v133
    %v136 = vmul.f32 %v132, %v134
    %v137 = vmul.f32 %v133, %v135
    %v138 = vsub.f32 2.0, %v136
    %v139 = vsub.f32 2.0, %v137
    %v140 = vmul.f32 %v134, %v138
    %v141 = vmul.f32 %v135, %v139
    %v142 = vmul.f32 %v140, 1.0614054
    %v143 = vmul.f32 %v141, 1.0614054
    %v144 = vadd.f32 %v142, -1.4531521
    %v145 = vadd.f32 %v143, -1.4531521
    %v146 = vmul.f32 %v144, %v140
    %v147 = vmul.f32 %v145, %v141
    %v148 = vadd.f32 %v146, 1.4214138
    %v149 = vadd.f32 %v147, 1.4214138
    %v150 = vmul.f32 %v148, %v140
    %v151 = vmul.f32 %v149, %v141
    %v152 = vadd.f32 %v150, -0.28449672
    %v153 = vadd.f32 %v151, -0.28449672
    %v154 = vmul.f32 %v152, %v140
    %v155 = vmul.f32 %v153, %v141
    %v156 = vadd.f32 %v154, 0.2548296
    %v157 = vadd.f32 %v155, 0.2548296
    %v158 = vmul.f32 %v156, %v140
    %v159 = vmul.f32 %v157, %v141
    %v160 = vsub.f32 0.0, %v128
    %v161 = vsub.f32 0.0, %v129
    %v162 = vmul.f32 %v160, %v128
    %v163 = vmul.f32 %v161, %v129
    %v164 = vmul.f32 %v162, 1.442695
    %v165 = vpow.pop %v164
    %v166 = vmul.f32 %v163, 1.442695
    %v167 = vpow.pop %v166
    %v168 = vmul.f32 %v158, %v165
    %v169 = vmul.f32 %v159, %v167
    %v170 = vsub.f32 1.0, %v168
    %v171 = vsub.f32 1.0, %v169
    %vm172 = vcmp.ge.f32.partialorder %v126, 0.0
    %vm173 = vcmp.ge.f32.partialorder %v127, 0.0
    %v174 = vsub.f32 0.0, %v170
    %v175 = vsub.f32 0.0, %v171
    %v176 = vsel %vm172, %v170, %v174
    %v177 = vsel %vm173, %v171, %v175
    %v178 = vadd.f32 %v176, 1.0
    %v179 = vadd.f32 %v177, 1.0
    %v180 = vmul.f32 %v124, %v178
    %v181 = vmul.f32 %v125, %v179
    %182 = vst [vmem:[#allocation2] sm:$0xff] %v180
    %183 = vst [vmem:[#allocation2 + $0x8] sm:$0xff] %v181
    // Predicated region
    $region14: #{tpu_custom_call.1} parent=1 // pred_check
      _
    $region15: #{tpu_custom_call.1} parent=1 // pred_check_branch
      %185 = sbr.rel (0) target = $region17
    $region16: #{tpu_custom_call.1} parent=1 // pred_region
      %187 = vsyncadd [#allocation3], 0
      %s188 = sshll.u32 [#allocation2], 4
      %s189 = int_to_ptr.vmem [resolvable:$true] %s188
      %s190 = sshll.u32 %s3, 4
      %s191 = int_to_ptr.hbm [resolvable:$true] %s190
      %196 = dma.vmem_to_hbm [thread:$0]  %s189, 256, %s191, [#allocation3], 128, 128, 8
    $region17: #{tpu_custom_call.1} parent=1 // pred_fallthru
      _
    // Predicated region
    $region18: #{tpu_custom_call.1} parent=1 // pred_check
      _
    $region19: #{tpu_custom_call.1} parent=1 // pred_check_branch
      %198 = sbr.rel (0) target = $region21
    $region20: #{tpu_custom_call.1} parent=1 // pred_region
      %200 = dma.done [#allocation3], 256
    $region21: #{tpu_custom_call.1} parent=1 // pred_fallthru
      _
    %201 = vsyncpa [#allocation3], 1

</llo_original>
